<compile_context>
chip_gen: v7x
topology: tpu7x:2x2x1
jax: 0.10.0
libtpu: 0.0.40
codegen_flags: <defaults>
</compile_context>

<pallas_src>
import functools

import jax
import jax.numpy as jnp
from jax.experimental import pallas as pl
from jax.experimental.pallas import tpu as pltpu


def _round_up(n, m):
    return ((n + m - 1) // m) * m


def _has_bf16_vpu():
    """True on v6e / v7x style chips; v5 and older lack a bf16 VPU path."""
    try:
        kind = jax.devices()[0].device_kind.lower()
    except Exception:
        return False
    return not any(tag in kind for tag in ("v2", "v3", "v4", "v5"))


def _choose_tiling(B):
    """Pick (bm, B_pad). >=2 even grid steps for B>=256 (v7x dual-TC),
    <=512 rows/step (v5e spill cap), single step for small batches."""
    B8 = _round_up(B, 8)
    if B8 < 256:
        bm = B8
    else:
        bm = max(128, min(512, _round_up(pl.cdiv(B8, 2), 8)))
    B_pad = _round_up(B8, bm)
    return bm, B_pad


# ----------------------------------------------------------------------------
# Kernel
# ----------------------------------------------------------------------------
def _mlp_kernel(x_ref, w1_ref, b1_ref, w2_ref, b2_ref, w3_ref, b3_ref,
                w4_ref, b4_ref, o_ref):
    # Cast x to bf16 on the VPU (hides under the x-tile DMA).
    x = x_ref[...].astype(w1_ref.dtype)

    # The activation dtype (bf16 on v6e/v7x, f32 on v5e) is carried by the
    # bias dtype chosen in prepare_params(). Accumulation is always f32.
    # Layer 1: Linear(in_dim, h1) + ReLU   (Dropout -> identity in eval)
    h = jnp.dot(x, w1_ref[...], preferred_element_type=jnp.float32)
    h = jnp.maximum(h.astype(b1_ref.dtype) + b1_ref[...], 0.0)
    # Layer 2: Linear(h1, h1) + ReLU
    h = jnp.dot(h.astype(w2_ref.dtype), w2_ref[...],
                preferred_element_type=jnp.float32)
    h = jnp.maximum(h.astype(b2_ref.dtype) + b2_ref[...], 0.0)
    # Layer 3: Linear(h1, h2) + ReLU
    h = jnp.dot(h.astype(w3_ref.dtype), w3_ref[...],
                preferred_element_type=jnp.float32)
    h = jnp.maximum(h.astype(b3_ref.dtype) + b3_ref[...], 0.0)
    # Layer 4: Linear(h2, out_dim_padded)  (no activation)
    out = jnp.dot(h.astype(w4_ref.dtype), w4_ref[...],
                  preferred_element_type=jnp.float32)
    o_ref[...] = (out + b4_ref[...]).astype(o_ref.dtype)


# ----------------------------------------------------------------------------
# One-time parameter preparation (hoisted out of the per-call path)
# ----------------------------------------------------------------------------
def prepare_params(params, use_bf16_act=None):
    """Cast weights to bf16 and lane-pad the last layer once, up front."""
    if use_bf16_act is None:
        use_bf16_act = _has_bf16_vpu()
    act_dtype = jnp.bfloat16 if use_bf16_act else jnp.float32

    out_dim = params["w4"].shape[1]
    n_pad = _round_up(out_dim, 128)     # lane-dense output (unmasked vst)

    return dict(
        w1=params["w1"].astype(jnp.bfloat16),
        b1=params["b1"].astype(act_dtype),
        w2=params["w2"].astype(jnp.bfloat16),
        b2=params["b2"].astype(act_dtype),
        w3=params["w3"].astype(jnp.bfloat16),
        b3=params["b3"].astype(act_dtype),
        w4=jnp.pad(params["w4"],
                   ((0, 0), (0, n_pad - out_dim))).astype(jnp.bfloat16),
        b4=jnp.pad(params["b4"],
                   ((0, 0), (0, n_pad - out_dim))).astype(jnp.float32),
    )


# ----------------------------------------------------------------------------
# Forward (jitted)
# ----------------------------------------------------------------------------
def _regression_forward(x, fp, *, out_dim):
    B, in_dim = x.shape
    n_pad = fp["w4"].shape[1]
    out_dtype = x.dtype

    bm, B_pad = _choose_tiling(B)
    xp = x if B_pad == B else jnp.pad(x, ((0, B_pad - B), (0, 0)))

    def resident(shape):
        # Whole-array block, same block every grid step -> stays in VMEM.
        return pl.BlockSpec(shape, lambda i: (0,) * len(shape))

    out_padded = pl.pallas_call(
        _mlp_kernel,
        out_shape=jax.ShapeDtypeStruct((B_pad, n_pad), jnp.bfloat16),
        grid_spec=pl.GridSpec(
            grid=(B_pad // bm,),
            in_specs=[
                pl.BlockSpec((bm, in_dim), lambda i: (i, 0)),   # x tile (f32)
                resident(fp["w1"].shape), resident(fp["b1"].shape),
                resident(fp["w2"].shape), resident(fp["b2"].shape),
                resident(fp["w3"].shape), resident(fp["b3"].shape),
                resident(fp["w4"].shape), resident(fp["b4"].shape),
            ],
            out_specs=pl.BlockSpec((bm, n_pad), lambda i: (i, 0)),
        ),
        compiler_params=pltpu.CompilerParams(
            dimension_semantics=("parallel",)),
    )(xp, fp["w1"], fp["b1"], fp["w2"], fp["b2"], fp["w3"], fp["b3"],
      fp["w4"], fp["b4"])

    return out_padded[:B, :out_dim].astype(out_dtype)


def make_regression_forward(params, use_bf16_act=None):
    """Build a jitted forward with weights pre-cast/pre-padded once."""
    fast_params = prepare_params(params, use_bf16_act)
    out_dim = params["w4"].shape[1]
    fwd = jax.jit(functools.partial(_regression_forward, out_dim=out_dim))
    return lambda x: fwd(x, fast_params)


# Convenience single-shot API (kept for compatibility with the old entry
# point); prefer make_regression_forward() for repeated calls.
def regression_layer_forward(x, params):
    return make_regression_forward(params)(x)


# ----------------------------------------------------------------------------
# Init / reference / test
# ----------------------------------------------------------------------------
def init_params(key, in_dim, h1, h2, out_dim, dtype=jnp.float32):
    """Deterministic init mimicking nn.Linear's uniform(-1/sqrt(fan_in), +)."""
    ks = jax.random.split(key, 8)

    def linear(kw, kb, fan_in, fan_out):
        bound = 1.0 / jnp.sqrt(jnp.asarray(fan_in, jnp.float32))
        w = jax.random.uniform(kw, (fan_in, fan_out), dtype, -bound, bound)
        b = jax.random.uniform(kb, (1, fan_out), dtype, -bound, bound)
        return w, b

    w1, b1 = linear(ks[0], ks[1], in_dim, h1)
    w2, b2 = linear(ks[2], ks[3], h1, h1)
    w3, b3 = linear(ks[4], ks[5], h1, h2)
    w4, b4 = linear(ks[6], ks[7], h2, out_dim)
    return dict(w1=w1, b1=b1, w2=w2, b2=b2, w3=w3, b3=b3, w4=w4, b4=b4)


def _reference(x, p):
    h = jnp.maximum(x @ p["w1"] + p["b1"], 0.0)
    h = jnp.maximum(h @ p["w2"] + p["b2"], 0.0)
    h = jnp.maximum(h @ p["w3"] + p["b3"], 0.0)
    return h @ p["w4"] + p["b4"]


if __name__ == "__main__":
    # Shapes consistent with the module: in_dim=32, hidden_dim_1=64,
    # hidden_dim_2=32, out_dim=8, dropout=0.1 (eval -> no-op).
    IN_DIM, H1, H2, OUT_DIM = 32, 64, 32, 8

    key = jax.random.PRNGKey(0)
    kx, kp, kx2 = jax.random.split(key, 3)
    params = init_params(kp, IN_DIM, H1, H2, OUT_DIM)

    forward = make_regression_forward(params)

    # Small batch (single tile, grid=(1,)).
    B_small = 8
    x_small = jax.random.normal(kx, (B_small, IN_DIM), jnp.float32)
    out_small = jax.block_until_ready(forward(x_small))
    ref_small = _reference(x_small, params)
    assert out_small.shape == (B_small, OUT_DIM)
    # bf16 MXU operands + bf16 output -> matches f32 reference to ~1e-2.
    assert jnp.allclose(out_small, ref_small, atol=5e-2, rtol=5e-2), (
        float(jnp.max(jnp.abs(out_small - ref_small))))

    # Larger, non-multiple batch (exercises 2-step grid + padding path).
    B_big = 600
    x_big = jax.random.normal(kx2, (B_big, IN_DIM), jnp.float32)
    out_big = jax.block_until_ready(forward(x_big))
    ref_big = _reference(x_big, params)
    assert out_big.shape == (B_big, OUT_DIM)
    assert jnp.allclose(out_big, ref_big, atol=5e-2, rtol=5e-2), (
        float(jnp.max(jnp.abs(out_big - ref_big))))

    print("KERNEL_OK")
</pallas_src>

<mosaic_0001>
module attributes {stable_mosaic.version = 11 : i64} {
  func.func @_mlp_kernel(%arg0: i32, %arg1: memref<8x32xf32, #tpu.memory_space<vmem>>, %arg2: memref<32x64xbf16, #tpu.memory_space<vmem>>, %arg3: memref<1x64xbf16, #tpu.memory_space<vmem>>, %arg4: memref<64x64xbf16, #tpu.memory_space<vmem>>, %arg5: memref<1x64xbf16, #tpu.memory_space<vmem>>, %arg6: memref<64x32xbf16, #tpu.memory_space<vmem>>, %arg7: memref<1x32xbf16, #tpu.memory_space<vmem>>, %arg8: memref<32x128xbf16, #tpu.memory_space<vmem>>, %arg9: memref<1x128xf32, #tpu.memory_space<vmem>>, %arg10: memref<8x128xbf16, #tpu.memory_space<vmem>>) attributes {dimension_semantics = [#tpu.dimension_semantics<parallel>], iteration_bounds = array<i64: 1>, scalar_prefetch = 0 : i64, scratch_operands = 0 : i64, tpu.core_type = #tpu.core_type<tc>, window_params = [{transform_indices = @transform_0, window_bounds = array<i64: 8, 32>}, {pipeline_mode = #tpu.pipeline_mode<synchronous>, transform_indices = @transform_1, window_bounds = array<i64: 32, 64>}, {pipeline_mode = #tpu.pipeline_mode<synchronous>, transform_indices = @transform_2, window_bounds = array<i64: 1, 64>}, {pipeline_mode = #tpu.pipeline_mode<synchronous>, transform_indices = @transform_3, window_bounds = array<i64: 64, 64>}, {pipeline_mode = #tpu.pipeline_mode<synchronous>, transform_indices = @transform_4, window_bounds = array<i64: 1, 64>}, {pipeline_mode = #tpu.pipeline_mode<synchronous>, transform_indices = @transform_5, window_bounds = array<i64: 64, 32>}, {pipeline_mode = #tpu.pipeline_mode<synchronous>, transform_indices = @transform_6, window_bounds = array<i64: 1, 32>}, {pipeline_mode = #tpu.pipeline_mode<synchronous>, transform_indices = @transform_7, window_bounds = array<i64: 32, 128>}, {pipeline_mode = #tpu.pipeline_mode<synchronous>, transform_indices = @transform_8, window_bounds = array<i64: 1, 128>}, {transform_indices = @transform_9, window_bounds = array<i64: 8, 128>}]} {
    %c0 = arith.constant 0 : index
    %c0_0 = arith.constant 0 : index
    %0 = vector.load %arg1[%c0, %c0_0] : memref<8x32xf32, #tpu.memory_space<vmem>>, vector<8x32xf32>
    %1 = arith.truncf %0 : vector<8x32xf32> to vector<8x32xbf16>
    %c0_1 = arith.constant 0 : index
    %c0_2 = arith.constant 0 : index
    %2 = vector.load %arg2[%c0_1, %c0_2] : memref<32x64xbf16, #tpu.memory_space<vmem>>, vector<32x64xbf16>
    %cst = arith.constant dense<0.000000e+00> : vector<8x64xf32>
    %3 = tpu.matmul %1, %2, %cst {dimension_numbers = #tpu.dot_dimension_numbers<[1], [0], [0], [1], [0, 0, 1, 1], [], []>} : vector<8x32xbf16>, vector<32x64xbf16>, vector<8x64xf32> -> vector<8x64xf32>
    %4 = arith.truncf %3 : vector<8x64xf32> to vector<8x64xbf16>
    %c0_3 = arith.constant 0 : index
    %c0_4 = arith.constant 0 : index
    %5 = vector.load %arg3[%c0_3, %c0_4] : memref<1x64xbf16, #tpu.memory_space<vmem>>, vector<1x64xbf16>
    %6 = vector.broadcast %5 : vector<1x64xbf16> to vector<8x64xbf16>
    %7 = arith.addf %4, %6 : vector<8x64xbf16>
    %cst_5 = arith.constant 0.000000e+00 : bf16
    %8 = vector.broadcast %cst_5 : bf16 to vector<8x64xbf16>
    %9 = arith.maximumf %7, %8 : vector<8x64xbf16>
    %c0_6 = arith.constant 0 : index
    %c0_7 = arith.constant 0 : index
    %10 = vector.load %arg4[%c0_6, %c0_7] : memref<64x64xbf16, #tpu.memory_space<vmem>>, vector<64x64xbf16>
    %cst_8 = arith.constant dense<0.000000e+00> : vector<8x64xf32>
    %11 = tpu.matmul %9, %10, %cst_8 {dimension_numbers = #tpu.dot_dimension_numbers<[1], [0], [0], [1], [0, 0, 1, 1], [], []>} : vector<8x64xbf16>, vector<64x64xbf16>, vector<8x64xf32> -> vector<8x64xf32>
    %12 = arith.truncf %11 : vector<8x64xf32> to vector<8x64xbf16>
    %c0_9 = arith.constant 0 : index
    %c0_10 = arith.constant 0 : index
    %13 = vector.load %arg5[%c0_9, %c0_10] : memref<1x64xbf16, #tpu.memory_space<vmem>>, vector<1x64xbf16>
    %14 = vector.broadcast %13 : vector<1x64xbf16> to vector<8x64xbf16>
    %15 = arith.addf %12, %14 : vector<8x64xbf16>
    %cst_11 = arith.constant 0.000000e+00 : bf16
    %16 = vector.broadcast %cst_11 : bf16 to vector<8x64xbf16>
    %17 = arith.maximumf %15, %16 : vector<8x64xbf16>
    %c0_12 = arith.constant 0 : index
    %c0_13 = arith.constant 0 : index
    %18 = vector.load %arg6[%c0_12, %c0_13] : memref<64x32xbf16, #tpu.memory_space<vmem>>, vector<64x32xbf16>
    %cst_14 = arith.constant dense<0.000000e+00> : vector<8x32xf32>
    %19 = tpu.matmul %17, %18, %cst_14 {dimension_numbers = #tpu.dot_dimension_numbers<[1], [0], [0], [1], [0, 0, 1, 1], [], []>} : vector<8x64xbf16>, vector<64x32xbf16>, vector<8x32xf32> -> vector<8x32xf32>
    %20 = arith.truncf %19 : vector<8x32xf32> to vector<8x32xbf16>
    %c0_15 = arith.constant 0 : index
    %c0_16 = arith.constant 0 : index
    %21 = vector.load %arg7[%c0_15, %c0_16] : memref<1x32xbf16, #tpu.memory_space<vmem>>, vector<1x32xbf16>
    %22 = vector.broadcast %21 : vector<1x32xbf16> to vector<8x32xbf16>
    %23 = arith.addf %20, %22 : vector<8x32xbf16>
    %cst_17 = arith.constant 0.000000e+00 : bf16
    %24 = vector.broadcast %cst_17 : bf16 to vector<8x32xbf16>
    %25 = arith.maximumf %23, %24 : vector<8x32xbf16>
    %c0_18 = arith.constant 0 : index
    %c0_19 = arith.constant 0 : index
    %26 = vector.load %arg8[%c0_18, %c0_19] : memref<32x128xbf16, #tpu.memory_space<vmem>>, vector<32x128xbf16>
    %cst_20 = arith.constant dense<0.000000e+00> : vector<8x128xf32>
    %27 = tpu.matmul %25, %26, %cst_20 {dimension_numbers = #tpu.dot_dimension_numbers<[1], [0], [0], [1], [0, 0, 1, 1], [], []>} : vector<8x32xbf16>, vector<32x128xbf16>, vector<8x128xf32> -> vector<8x128xf32>
    %c0_21 = arith.constant 0 : index
    %c0_22 = arith.constant 0 : index
    %28 = vector.load %arg9[%c0_21, %c0_22] : memref<1x128xf32, #tpu.memory_space<vmem>>, vector<1x128xf32>
    %29 = vector.broadcast %28 : vector<1x128xf32> to vector<8x128xf32>
    %30 = arith.addf %27, %29 : vector<8x128xf32>
    %31 = arith.truncf %30 : vector<8x128xf32> to vector<8x128xbf16>
    %c0_23 = arith.constant 0 : index
    %c0_24 = arith.constant 0 : index
    %32 = vector.load %arg10[%c0_23, %c0_24] : memref<8x128xbf16, #tpu.memory_space<vmem>>, vector<8x128xbf16>
    tpu.vector_store %arg10[%c0_23, %c0_24], %31 {strides = array<i32>} : memref<8x128xbf16, #tpu.memory_space<vmem>>, vector<8x128xbf16>,
    return
  }
  func.func @transform_0(%arg0: i32) -> (i32, i32) {
    %c0_i32 = arith.constant 0 : i32
    %c0_i32_0 = arith.constant 0 : i32
    return %arg0, %c0_i32 : i32, i32
  }
  func.func @transform_1(%arg0: i32) -> (i32, i32) {
    %c0_i32 = arith.constant 0 : i32
    %c0_i32_0 = arith.constant 0 : i32
    %c0_i32_1 = arith.constant 0 : i32
    return %c0_i32, %c0_i32_0 : i32, i32
  }
  func.func @transform_2(%arg0: i32) -> (i32, i32) {
    %c0_i32 = arith.constant 0 : i32
    %c0_i32_0 = arith.constant 0 : i32
    %c0_i32_1 = arith.constant 0 : i32
    return %c0_i32, %c0_i32_0 : i32, i32
  }
  func.func @transform_3(%arg0: i32) -> (i32, i32) {
    %c0_i32 = arith.constant 0 : i32
    %c0_i32_0 = arith.constant 0 : i32
    %c0_i32_1 = arith.constant 0 : i32
    return %c0_i32, %c0_i32_0 : i32, i32
  }
  func.func @transform_4(%arg0: i32) -> (i32, i32) {
    %c0_i32 = arith.constant 0 : i32
    %c0_i32_0 = arith.constant 0 : i32
    %c0_i32_1 = arith.constant 0 : i32
    return %c0_i32, %c0_i32_0 : i32, i32
  }
  func.func @transform_5(%arg0: i32) -> (i32, i32) {
    %c0_i32 = arith.constant 0 : i32
    %c0_i32_0 = arith.constant 0 : i32
    %c0_i32_1 = arith.constant 0 : i32
    return %c0_i32, %c0_i32_0 : i32, i32
  }
  func.func @transform_6(%arg0: i32) -> (i32, i32) {
    %c0_i32 = arith.constant 0 : i32
    %c0_i32_0 = arith.constant 0 : i32
    %c0_i32_1 = arith.constant 0 : i32
    return %c0_i32, %c0_i32_0 : i32, i32
  }
  func.func @transform_7(%arg0: i32) -> (i32, i32) {
    %c0_i32 = arith.constant 0 : i32
    %c0_i32_0 = arith.constant 0 : i32
    %c0_i32_1 = arith.constant 0 : i32
    return %c0_i32, %c0_i32_0 : i32, i32
  }
  func.func @transform_8(%arg0: i32) -> (i32, i32) {
    %c0_i32 = arith.constant 0 : i32
    %c0_i32_0 = arith.constant 0 : i32
    %c0_i32_1 = arith.constant 0 : i32
    return %c0_i32, %c0_i32_0 : i32, i32
  }
  func.func @transform_9(%arg0: i32) -> (i32, i32) {
    %c0_i32 = arith.constant 0 : i32
    %c0_i32_0 = arith.constant 0 : i32
    return %arg0, %c0_i32 : i32, i32
  }
}

</mosaic_0001>

<llo_original>
// kernel: _regression_forward.1
$region0: #{_regression_forward.1}
  #allocation0 [shape = 'u32[]', space=smem, size = 0x4, offset = 0x4, fixed_abs, tag = 'smem constant byte address 0x4 - core index']
  #allocation1 [shape = 'u32[144,128]{1,0:T(1,128)}', space=vmem, size = 0x12000, scoped, tag = 'internal scratch']
  %s0 = inlined_call_operand.vmem [shape: f32[8,32], index: 0, kind: input, shape index: {}]
  %s1 = inlined_call_operand.vmem [shape: bf16[32,64], index: 1, kind: input, shape index: {}]
  %s2 = inlined_call_operand.vmem [shape: bf16[1,64], index: 2, kind: input, shape index: {}]
  %s3 = inlined_call_operand.vmem [shape: bf16[64,64], index: 3, kind: input, shape index: {}]
  %s4 = inlined_call_operand.vmem [shape: bf16[1,64], index: 4, kind: input, shape index: {}]
  %s5 = inlined_call_operand.vmem [shape: bf16[64,32], index: 5, kind: input, shape index: {}]
  %s6 = inlined_call_operand.hbm [shape: bf16[1,32], index: 6, kind: input, shape index: {}]
  %s7 = inlined_call_operand.hbm [shape: bf16[32,128], index: 7, kind: input, shape index: {}]
  %s8 = inlined_call_operand.hbm [shape: f32[1,128], index: 8, kind: input, shape index: {}]
  %s9 = inlined_call_operand.vmem [shape: bf16[8,128], index: 9, kind: output, shape index: {}]
  %s10 = sld [smem:[#allocation0]]
  $region58: #{_regression_forward.1} parent=0
    _
  %s12 = ssub.s32 1, %s10
  %s13 = scalar_select 0, %s12, %s10
  $region1: #{_regression_forward.1} parent=0
    #allocation2 [shape = 'u8[512]{0}', space=vmem, size = 0x400, scoped, tag = 'input window, operand 6, single buffered']
    #allocation3 [shape = 's32[1]{0}', space=sflag, size = 0x4, scoped, tag = 'scoped memory for _regression_forward.1']
    #allocation4 [shape = 'u8[8192]{0}', space=vmem, size = 0x2000, scoped, tag = 'input window, operand 7, single buffered']
    #allocation5 [shape = 's32[1]{0}', space=sflag, size = 0x4, scoped, tag = 'scoped memory for _regression_forward.1']
    #allocation6 [shape = 'u8[512]{0}', space=vmem, size = 0x400, scoped, tag = 'input window, operand 8, single buffered']
    %14 = vsyncpa [#allocation3], 0
    %15 = vsyncpa [#allocation5], 0
    // Predicated region
    $region2: #{_regression_forward.1} parent=1 // pred_check
      _
    $region3: #{_regression_forward.1} parent=1 // pred_check_branch
      %17 = sbr.rel (0) target = $region5
    $region4: #{_regression_forward.1} parent=1 // pred_region
      _
    $region5: #{_regression_forward.1} parent=1 // pred_fallthru
      _
    // Predicated region
    $region6: #{_regression_forward.1} parent=1 // pred_check
      _
    $region7: #{_regression_forward.1} parent=1 // pred_check_branch
      %19 = sbr.rel (0) target = $region9
    $region8: #{_regression_forward.1} parent=1 // pred_region
      _
    $region9: #{_regression_forward.1} parent=1 // pred_fallthru
      _
    // Predicated region
    $region10: #{_regression_forward.1} parent=1 // pred_check
      _
    $region11: #{_regression_forward.1} parent=1 // pred_check_branch
      %21 = sbr.rel (0) target = $region13
    $region12: #{_regression_forward.1} parent=1 // pred_region
      _
    $region13: #{_regression_forward.1} parent=1 // pred_fallthru
      _
    // Predicated region
    $region14: #{_regression_forward.1} parent=1 // pred_check
      _
    $region15: #{_regression_forward.1} parent=1 // pred_check_branch
      %23 = sbr.rel (0) target = $region17
    $region16: #{_regression_forward.1} parent=1 // pred_region
      _
    $region17: #{_regression_forward.1} parent=1 // pred_fallthru
      _
    // Predicated region
    $region18: #{_regression_forward.1} parent=1 // pred_check
      _
    $region19: #{_regression_forward.1} parent=1 // pred_check_branch
      %25 = sbr.rel (0) target = $region21
    $region20: #{_regression_forward.1} parent=1 // pred_region
      _
    $region21: #{_regression_forward.1} parent=1 // pred_fallthru
      _
    // Predicated region
    $region22: #{_regression_forward.1} parent=1 // pred_check
      _
    $region23: #{_regression_forward.1} parent=1 // pred_check_branch
      %27 = sbr.rel (0) target = $region25
    $region24: #{_regression_forward.1} parent=1 // pred_region
      _
    $region25: #{_regression_forward.1} parent=1 // pred_fallthru
      _
    // Predicated region
    $region26: #{_regression_forward.1} parent=1 // pred_check
      _
    $region27: #{_regression_forward.1} parent=1 // pred_check_branch
      %29 = sbr.rel (0) target = $region29
    $region28: #{_regression_forward.1} parent=1 // pred_region
      %s31 = ssub.s32 16, 16
      %32 = vsyncadd [#allocation3], %s31
      %s34 = sshll.u32 [#allocation2], 4
      %s35 = int_to_ptr.vmem [resolvable:$true] %s34
      %37 = dma.hbm_to_vmem [thread:$0]  %s6, 16, %s35, [#allocation3]
    $region29: #{_regression_forward.1} parent=1 // pred_fallthru
      _
    // Predicated region
    $region30: #{_regression_forward.1} parent=1 // pred_check
      _
    $region31: #{_regression_forward.1} parent=1 // pred_check_branch
      %39 = sbr.rel (0) target = $region33
    $region32: #{_regression_forward.1} parent=1 // pred_region
      %s41 = ssub.s32 256, 256
      %42 = vsyncadd [#allocation5], %s41
      %s43 = sshll.u32 [#allocation4], 4
      %s44 = int_to_ptr.vmem [resolvable:$true] %s43
      %49 = dma.hbm_to_vmem [thread:$0]  %s7, 256, %s44, [#allocation5], 64, 64, 4
    $region33: #{_regression_forward.1} parent=1 // pred_fallthru
      _
    // Predicated region
    $region34: #{_regression_forward.1} parent=1 // pred_check
      _
    $region35: #{_regression_forward.1} parent=1 // pred_check_branch
      %51 = sbr.rel (0) target = $region37
    $region36: #{_regression_forward.1} parent=1 // pred_region
      %s53 = ssub.s32 16, 16
      %54 = vsyncadd [#allocation5], %s53
      %s56 = sshll.u32 [#allocation6], 4
      %s57 = int_to_ptr.vmem [resolvable:$true] %s56
      %59 = dma.hbm_to_vmem [thread:$0]  %s8, 16, %s57, [#allocation5]
    $region37: #{_regression_forward.1} parent=1 // pred_fallthru
      _
    // Predicated region
    $region38: #{_regression_forward.1} parent=1 // pred_check
      _
    $region39: #{_regression_forward.1} parent=1 // pred_check_branch
      %61 = sbr.rel (0) target = $region41
    $region40: #{_regression_forward.1} parent=1 // pred_region
      %62 = dma.done [#allocation3], 16
    $region41: #{_regression_forward.1} parent=1 // pred_fallthru
      _
    // Predicated region
    $region42: #{_regression_forward.1} parent=1 // pred_check
      _
    $region43: #{_regression_forward.1} parent=1 // pred_check_branch
      %64 = sbr.rel (0) target = $region45
    $region44: #{_regression_forward.1} parent=1 // pred_region
      %65 = dma.done [#allocation5], 256
    $region45: #{_regression_forward.1} parent=1 // pred_fallthru
      _
    // Predicated region
    $region46: #{_regression_forward.1} parent=1 // pred_check
      _
    $region47: #{_regression_forward.1} parent=1 // pred_check_branch
      %67 = sbr.rel (0) target = $region49
    $region48: #{_regression_forward.1} parent=1 // pred_region
      %68 = dma.done [#allocation5], 16
    $region49: #{_regression_forward.1} parent=1 // pred_fallthru
      _
    %v70 = vld [vmem:[%s0] sm:$0xff]
    %v71 = vpack.c.bf16 %v70, %v70
    %v72 = vld [vmem:[%s1] sm:$0xf]
    %v73 = vld [vmem:[%s1 + $0x4] sm:$0xf]
    %v74 = vld [vmem:[%s1 + $0x8] sm:$0xf]
    %v75 = vld [vmem:[%s1 + $0xc] sm:$0xf]
    %v80 = vunpack.c.l.b16 %v72
    %v81 = vunpack.c.l.b16 %v73
    %v82 = vunpack.c.l.b16 %v74
    %v83 = vunpack.c.l.b16 %v75
    %v84 = vpack.c.b16 %v81, %v80
    %v85 = vpack.c.b16 %v83, %v82
    %vm88 = vcmask 261120
    %v90 = vsel %vm88, %v71, 0
    %92 = vmatprep.subr.bf16.mxu0 0
    %93 = vmatpush1.bf16.msra.mxu0 %v84
    %94 = vmatprep.subr.bf16.mxu0 0
    %95 = vmatpush1.bf16.msra.mxu0 %v85
    %96 = vmatprep.subr.bf16.mxu0 0
    %97 = vmatpush1.bf16.msra.mxu0 0
    %98 = vmatprep.subr.bf16.mxu0 0
    %99 = vmatpush1.bf16.msra.mxu0 0
    %100 = vmatprep.subr.bf16.mxu0 0
    %101 = vmatpush1.bf16.msra.mxu0 0
    %102 = vmatprep.subr.bf16.mxu0 0
    %103 = vmatpush1.bf16.msra.mxu0 0
    %104 = vmatprep.subr.bf16.mxu0 0
    %105 = vmatpush1.bf16.msra.mxu0 0
    %106 = vmatprep.subr.bf16.mxu0 0
    %107 = vmatpush1.bf16.msra.mxu0 0
    %108 = vmatprep.subr.bf16.mxu0 0
    %109 = vmatpush1.bf16.msra.mxu0 0
    %110 = vmatprep.subr.bf16.mxu0 0
    %111 = vmatpush1.bf16.msra.mxu0 0
    %112 = vmatprep.subr.bf16.mxu0 0
    %113 = vmatpush1.bf16.msra.mxu0 0
    %114 = vmatprep.subr.bf16.mxu0 0
    %115 = vmatpush1.bf16.msra.mxu0 0
    %116 = vmatprep.subr.bf16.mxu0 0
    %117 = vmatpush1.bf16.msra.mxu0 0
    %118 = vmatprep.subr.bf16.mxu0 0
    %119 = vmatpush1.bf16.msra.mxu0 0
    %120 = vmatprep.subr.bf16.mxu0 0
    %121 = vmatpush1.bf16.msra.mxu0 0
    %122 = vmatprep.subr.bf16.mxu0 0
    %123 = vmatpush1.bf16.msra.mxu0 0
    %124 = vmatprep.mubr.bf16.mxu0 0
    %125 = vmatmul.mubr.bf16.gmra.mrb[0].mxu0 %v90
    %v126 = vpop.f32.mrb[0].mxu0
    %v127 = vadd.f32 0.0, %v126
    %v128 = vpop.f32.mrb[0].mxu0
    %v129 = vpop.f32.mrb[0].mxu0
    %v130 = vpop.f32.mrb[0].mxu0
    %131 = vdwg.mxu0
    %v132 = vpack.c.bf16 %v127, %v127
    %v133 = vld [vmem:[%s2] sm:$0x1]
    %v135 = vpack.i.b16 %v133, %v133
    %v137 = vlaneseq
    %v138 = vshrl.u32 %v137, 7
    %v139 = vsub.s32 0, %v138
    %v140 = vrot.slane %v135, %v139
    %v141 = vadd.bf16 %v132, %v140
    %v142 = vmax.bf16 %v141, 0
    %v143 = vld [vmem:[%s3] sm:$0xf]
    %v144 = vld [vmem:[%s3 + $0x4] sm:$0xf]
    %v145 = vld [vmem:[%s3 + $0x8] sm:$0xf]
    %v146 = vld [vmem:[%s3 + $0xc] sm:$0xf]
    %v147 = vld [vmem:[%s3 + $0x10] sm:$0xf]
    %v148 = vld [vmem:[%s3 + $0x14] sm:$0xf]
    %v149 = vld [vmem:[%s3 + $0x18] sm:$0xf]
    %v150 = vld [vmem:[%s3 + $0x1c] sm:$0xf]
    %v159 = vunpack.c.l.b16 %v143
    %v160 = vunpack.c.l.b16 %v144
    %v161 = vunpack.c.l.b16 %v145
    %v162 = vunpack.c.l.b16 %v146
    %v163 = vunpack.c.l.b16 %v147
    %v164 = vunpack.c.l.b16 %v148
    %v165 = vunpack.c.l.b16 %v149
    %v166 = vunpack.c.l.b16 %v150
    %v167 = vpack.c.b16 %v160, %v159
    %v168 = vpack.c.b16 %v162, %v161
    %v169 = vpack.c.b16 %v164, %v163
    %v170 = vpack.c.b16 %v166, %v165
    %vm175 = vcmask 523264
    %v177 = vsel %vm175, %v142, 0
    %179 = vmatprep.subr.bf16.mxu0 0
    %180 = vmatpush1.bf16.msra.mxu0 %v167
    %181 = vmatprep.subr.bf16.mxu0 0
    %182 = vmatpush1.bf16.msra.mxu0 %v168
    %183 = vmatprep.subr.bf16.mxu0 0
    %184 = vmatpush1.bf16.msra.mxu0 %v169
    %185 = vmatprep.subr.bf16.mxu0 0
    %186 = vmatpush1.bf16.msra.mxu0 %v170
    %187 = vmatprep.subr.bf16.mxu0 0
    %188 = vmatpush1.bf16.msra.mxu0 0
    %189 = vmatprep.subr.bf16.mxu0 0
    %190 = vmatpush1.bf16.msra.mxu0 0
    %191 = vmatprep.subr.bf16.mxu0 0
    %192 = vmatpush1.bf16.msra.mxu0 0
    %193 = vmatprep.subr.bf16.mxu0 0
    %194 = vmatpush1.bf16.msra.mxu0 0
    %195 = vmatprep.subr.bf16.mxu0 0
    %196 = vmatpush1.bf16.msra.mxu0 0
    %197 = vmatprep.subr.bf16.mxu0 0
    %198 = vmatpush1.bf16.msra.mxu0 0
    %199 = vmatprep.subr.bf16.mxu0 0
    %200 = vmatpush1.bf16.msra.mxu0 0
    %201 = vmatprep.subr.bf16.mxu0 0
    %202 = vmatpush1.bf16.msra.mxu0 0
    %203 = vmatprep.subr.bf16.mxu0 0
    %204 = vmatpush1.bf16.msra.mxu0 0
    %205 = vmatprep.subr.bf16.mxu0 0
    %206 = vmatpush1.bf16.msra.mxu0 0
    %207 = vmatprep.subr.bf16.mxu0 0
    %208 = vmatpush1.bf16.msra.mxu0 0
    %209 = vmatprep.subr.bf16.mxu0 0
    %210 = vmatpush1.bf16.msra.mxu0 0
    %211 = vmatprep.mubr.bf16.mxu0 0
    %212 = vmatmul.mubr.bf16.gmra.mrb[0].mxu0 %v177
    %v213 = vpop.f32.mrb[0].mxu0
    %v214 = vadd.f32 0.0, %v213
    %v215 = vpop.f32.mrb[0].mxu0
    %v216 = vpop.f32.mrb[0].mxu0
    %v217 = vpop.f32.mrb[0].mxu0
    %218 = vdwg.mxu0
    %v219 = vpack.c.bf16 %v214, %v214
    %v220 = vld [vmem:[%s4] sm:$0x1]
    %v222 = vpack.i.b16 %v220, %v220
    %v224 = vlaneseq
    %v225 = vshrl.u32 %v224, 7
    %v226 = vsub.s32 0, %v225
    %v227 = vrot.slane %v222, %v226
    %v228 = vadd.bf16 %v219, %v227
    %v229 = vmax.bf16 %v228, 0
    %v230 = vld [vmem:[%s5] sm:$0xf]
    %v231 = vld [vmem:[%s5 + $0x4] sm:$0xf]
    %v232 = vld [vmem:[%s5 + $0x8] sm:$0xf]
    %v233 = vld [vmem:[%s5 + $0xc] sm:$0xf]
    %v234 = vld [vmem:[%s5 + $0x10] sm:$0xf]
    %v235 = vld [vmem:[%s5 + $0x14] sm:$0xf]
    %v236 = vld [vmem:[%s5 + $0x18] sm:$0xf]
    %v237 = vld [vmem:[%s5 + $0x1c] sm:$0xf]
    %v246 = vunpack.c.l.b16 %v230
    %v247 = vunpack.c.l.b16 %v231
    %v248 = vunpack.c.l.b16 %v232
    %v249 = vunpack.c.l.b16 %v233
    %v250 = vunpack.c.l.b16 %v234
    %v251 = vunpack.c.l.b16 %v235
    %v252 = vunpack.c.l.b16 %v236
    %v253 = vunpack.c.l.b16 %v237
    %v254 = vpack.c.b16 %v247, %v246
    %v255 = vpack.c.b16 %v249, %v248
    %v256 = vpack.c.b16 %v251, %v250
    %v257 = vpack.c.b16 %v253, %v252
    %v263 = vsel %vm175, %v229, 0
    %265 = vmatprep.subr.bf16.mxu0 0
    %266 = vmatpush1.bf16.msra.mxu0 %v254
    %267 = vmatprep.subr.bf16.mxu0 0
    %268 = vmatpush1.bf16.msra.mxu0 %v255
    %269 = vmatprep.subr.bf16.mxu0 0
    %270 = vmatpush1.bf16.msra.mxu0 %v256
    %271 = vmatprep.subr.bf16.mxu0 0
    %272 = vmatpush1.bf16.msra.mxu0 %v257
    %273 = vmatprep.subr.bf16.mxu0 0
    %274 = vmatpush1.bf16.msra.mxu0 0
    %275 = vmatprep.subr.bf16.mxu0 0
    %276 = vmatpush1.bf16.msra.mxu0 0
    %277 = vmatprep.subr.bf16.mxu0 0
    %278 = vmatpush1.bf16.msra.mxu0 0
    %279 = vmatprep.subr.bf16.mxu0 0
    %280 = vmatpush1.bf16.msra.mxu0 0
    %281 = vmatprep.subr.bf16.mxu0 0
    %282 = vmatpush1.bf16.msra.mxu0 0
    %283 = vmatprep.subr.bf16.mxu0 0
    %284 = vmatpush1.bf16.msra.mxu0 0
    %285 = vmatprep.subr.bf16.mxu0 0
    %286 = vmatpush1.bf16.msra.mxu0 0
    %287 = vmatprep.subr.bf16.mxu0 0
    %288 = vmatpush1.bf16.msra.mxu0 0
    %289 = vmatprep.subr.bf16.mxu0 0
    %290 = vmatpush1.bf16.msra.mxu0 0
    %291 = vmatprep.subr.bf16.mxu0 0
    %292 = vmatpush1.bf16.msra.mxu0 0
    %293 = vmatprep.subr.bf16.mxu0 0
    %294 = vmatpush1.bf16.msra.mxu0 0
    %295 = vmatprep.subr.bf16.mxu0 0
    %296 = vmatpush1.bf16.msra.mxu0 0
    %297 = vmatprep.mubr.bf16.mxu0 0
    %298 = vmatmul.mubr.bf16.gmra.mrb[0].mxu0 %v263
    %v299 = vpop.f32.mrb[0].mxu0
    %v300 = vadd.f32 0.0, %v299
    %v301 = vpop.f32.mrb[0].mxu0
    %v302 = vpop.f32.mrb[0].mxu0
    %v303 = vpop.f32.mrb[0].mxu0
    %304 = vdwg.mxu0
    %v305 = vpack.c.bf16 %v300, %v300
    %v306 = vld [vmem:[#allocation2] sm:$0x1]
    %v308 = vpack.i.b16 %v306, %v306
    %v310 = vlaneseq
    %v311 = vshrl.u32 %v310, 7
    %v312 = vsub.s32 0, %v311
    %v313 = vrot.slane %v308, %v312
    %v314 = vadd.bf16 %v305, %v313
    %v315 = vmax.bf16 %v314, 0
    %v316 = vld [vmem:[#allocation4] sm:$0xf]
    %v317 = vld [vmem:[#allocation4 + $0x4] sm:$0xf]
    %v318 = vld [vmem:[#allocation4 + $0x8] sm:$0xf]
    %v319 = vld [vmem:[#allocation4 + $0xc] sm:$0xf]
    %v320 = vld [vmem:[#allocation6] sm:$0x1]
    %v322 = vlaneseq
    %v323 = vshrl.u32 %v322, 7
    %v324 = vsub.s32 0, %v323
    %v325 = vrot.slane %v320, %v324
    %v331 = vunpack.c.l.b16 %v316
    %v332 = vunpack.c.l.b16 %v317
    %v333 = vunpack.c.l.b16 %v318
    %v334 = vunpack.c.l.b16 %v319
    %v335 = vpack.c.b16 %v332, %v331
    %v336 = vpack.c.b16 %v334, %v333
    %v340 = vsel %vm88, %v315, 0
    %342 = vmatprep.subr.bf16.mxu0 0
    %343 = vmatpush1.bf16.msra.mxu0 %v335
    %344 = vmatprep.subr.bf16.mxu0 0
    %345 = vmatpush1.bf16.msra.mxu0 %v336
    %346 = vmatprep.subr.bf16.mxu0 0
    %347 = vmatpush1.bf16.msra.mxu0 0
    %348 = vmatprep.subr.bf16.mxu0 0
    %349 = vmatpush1.bf16.msra.mxu0 0
    %350 = vmatprep.subr.bf16.mxu0 0
    %351 = vmatpush1.bf16.msra.mxu0 0
    %352 = vmatprep.subr.bf16.mxu0 0
    %353 = vmatpush1.bf16.msra.mxu0 0
    %354 = vmatprep.subr.bf16.mxu0 0
    %355 = vmatpush1.bf16.msra.mxu0 0
    %356 = vmatprep.subr.bf16.mxu0 0
    %357 = vmatpush1.bf16.msra.mxu0 0
    %358 = vmatprep.subr.bf16.mxu0 0
    %359 = vmatpush1.bf16.msra.mxu0 0
    %360 = vmatprep.subr.bf16.mxu0 0
    %361 = vmatpush1.bf16.msra.mxu0 0
    %362 = vmatprep.subr.bf16.mxu0 0
    %363 = vmatpush1.bf16.msra.mxu0 0
    %364 = vmatprep.subr.bf16.mxu0 0
    %365 = vmatpush1.bf16.msra.mxu0 0
    %366 = vmatprep.subr.bf16.mxu0 0
    %367 = vmatpush1.bf16.msra.mxu0 0
    %368 = vmatprep.subr.bf16.mxu0 0
    %369 = vmatpush1.bf16.msra.mxu0 0
    %370 = vmatprep.subr.bf16.mxu0 0
    %371 = vmatpush1.bf16.msra.mxu0 0
    %372 = vmatprep.subr.bf16.mxu0 0
    %373 = vmatpush1.bf16.msra.mxu0 0
    %374 = vmatprep.mubr.bf16.mxu0 0
    %375 = vmatmul.mubr.bf16.gmra.mrb[0].mxu0 %v340
    %v376 = vpop.f32.mrb[0].mxu0
    %v377 = vadd.f32 %v325, %v376
    %v378 = vpop.f32.mrb[0].mxu0
    %v379 = vpop.f32.mrb[0].mxu0
    %v380 = vpop.f32.mrb[0].mxu0
    %381 = vdwg.mxu0
    %v382 = vpack.c.bf16 %v377, %v377
    %383 = vst [vmem:[%s9] sm:$0xf] %v382
    // Predicated region
    $region50: #{_regression_forward.1} parent=1 // pred_check
      _
    $region51: #{_regression_forward.1} parent=1 // pred_check_branch
      %385 = sbr.rel (0) target = $region53
    $region52: #{_regression_forward.1} parent=1 // pred_region
      _
    $region53: #{_regression_forward.1} parent=1 // pred_fallthru
      _
    // Predicated region
    $region54: #{_regression_forward.1} parent=1 // pred_check
      _
    $region55: #{_regression_forward.1} parent=1 // pred_check_branch
      %387 = sbr.rel (0) target = $region57
    $region56: #{_regression_forward.1} parent=1 // pred_region
      _
    $region57: #{_regression_forward.1} parent=1 // pred_fallthru
      _
    %388 = vsyncpa [#allocation3], 1
    %389 = vsyncpa [#allocation5], 1

</llo_original>
